<compile_context>
chip_gen: v7x
topology: tpu7x:2x2x1
jax: 0.10.0
libtpu: 0.0.40
codegen_flags: <defaults>
</compile_context>

<pallas_src>
import jax
import jax.numpy as jnp
from jax.experimental import pallas as pl
from jax.experimental.pallas import tpu as pltpu


def psf_forward(psf: jax.Array) -> jax.Array:
    """Hot path: PSF.forward() is `return self.psf` -- pure identity.

    No Pallas kernel is launched: an identity return is free in XLA, whereas
    any kernel launch over a 324-byte array is 100% overhead.
    """
    return psf


# ---- Optional Pallas form (retained only as a future fusion point) --------

def _psf_identity_kernel(psf_ref, out_ref):
    # forward(): return self.psf  (Softplus defined in __init__ is never used
    # in forward(), so the body is a straight copy).
    # TODO(synk): if Softplus is ever fused here, use
    #   out_ref[...] = jnp.logaddexp(psf_ref[...].astype(jnp.float32), 0.0)
    # (numerically stable; EUP slot is idle so it is effectively free).
    out_ref[...] = psf_ref[...]


def psf_forward_pallas(psf: jax.Array) -> jax.Array:
    """Pallas equivalent of PSF.forward().

    No input/output aliasing: the PSF is a persistent parameter that stays
    live, so the caller never has to make a defensive copy.  The output is a
    fresh (tiny) buffer; net this is cheaper than alias + caller copy.
    """
    assert psf.ndim == 2, "PSF must be 2-D"
    nbytes = psf.size * psf.dtype.itemsize
    return pl.pallas_call(
        _psf_identity_kernel,
        out_shape=jax.ShapeDtypeStruct(psf.shape, psf.dtype),
        # No grid: the whole (tiny) array is a single VMEM-resident block;
        # block_shape == full array dims satisfies the (8,128) tiling rules.
        in_specs=[pl.BlockSpec(memory_space=pltpu.MemorySpace.VMEM)],
        out_specs=pl.BlockSpec(memory_space=pltpu.MemorySpace.VMEM),
        # Advisory cost hint: read + write of the array, no flops.
        cost_estimate=pl.CostEstimate(
            flops=0, transcendentals=0, bytes_accessed=2 * nbytes),
    )(psf)


def make_psf_param(shape=(9, 9)) -> jax.Array:
    """Deterministic, in-script stand-in for the parameter built in __init__.

    Starts from the __init__ pre-load pattern (all -1 with +1 at the center)
    and adds small deterministic noise from PRNGKey(0).
    """
    assert len(shape) == 2 and shape[0] % 2 == 1 and shape[1] % 2 == 1, \
        "Invalid PSF shape"
    psf = jnp.full(shape, -1.0, dtype=jnp.float32)
    psf = psf.at[shape[0] // 2, shape[1] // 2].set(1.0)
    key = jax.random.PRNGKey(0)
    noise = 0.01 * jax.random.normal(key, shape, dtype=jnp.float32)
    # TODO(synk): real module overwrites this with np.load(file)['PSF']; no
    # file I/O allowed here, so we keep the synthetic deterministic PSF.
    return psf + noise


if __name__ == "__main__":
    psf_param = make_psf_param((9, 9))
    reference = jnp.array(psf_param, copy=True)  # independent copy for checks

    # Hot path: identity return, no kernel launch (review's primary fix).
    out_fast = jax.block_until_ready(psf_forward(psf_param))
    assert out_fast.shape == reference.shape
    assert out_fast.dtype == reference.dtype
    assert bool(jnp.array_equal(out_fast, reference))

    # Pallas form: no aliasing, so the original parameter is passed directly
    # and remains valid afterwards -- no defensive copy required.
    out_pallas = jax.block_until_ready(psf_forward_pallas(psf_param))
    assert out_pallas.shape == reference.shape
    assert out_pallas.dtype == reference.dtype
    assert bool(jnp.array_equal(out_pallas, reference))
    # Original parameter is still intact (no donation happened).
    assert bool(jnp.array_equal(psf_param, reference))

    print("KERNEL_OK")
</pallas_src>

<mosaic_0001>
module attributes {stable_mosaic.version = 11 : i64} {
  func.func @_psf_identity_kernel(%arg0: memref<9x9xf32, #tpu.memory_space<vmem>>, %arg1: memref<9x9xf32, #tpu.memory_space<vmem>>) attributes {dimension_semantics = [], scalar_prefetch = 0 : i64, scratch_operands = 0 : i64, tpu.core_type = #tpu.core_type<tc>} {
    %c0 = arith.constant 0 : index
    %c0_0 = arith.constant 0 : index
    %0 = vector.load %arg0[%c0, %c0_0] : memref<9x9xf32, #tpu.memory_space<vmem>>, vector<9x9xf32>
    %c0_1 = arith.constant 0 : index
    %c0_2 = arith.constant 0 : index
    %1 = vector.load %arg1[%c0_1, %c0_2] : memref<9x9xf32, #tpu.memory_space<vmem>>, vector<9x9xf32>
    tpu.vector_store %arg1[%c0_1, %c0_2], %0 {strides = array<i32>} : memref<9x9xf32, #tpu.memory_space<vmem>>, vector<9x9xf32>,
    return
  }
}

</mosaic_0001>

<llo_original>
// kernel: tpu_custom_call.1
$region0: #{tpu_custom_call.1}
  #allocation0 [shape = 'u32[]', space=smem, size = 0x4, offset = 0x4, fixed_abs, tag = 'smem constant byte address 0x4 - core index']
  #allocation1 [shape = 'u32[144,128]{1,0:T(1,128)}', space=vmem, size = 0x12000, scoped, tag = 'internal scratch']
  %s0 = inlined_call_operand.hbm [shape: f32[9,9], index: 0, kind: input, shape index: {}]
  %s1 = inlined_call_operand.hbm [shape: f32[9,9], index: 1, kind: output, shape index: {}]
  %s2 = sld [smem:[#allocation0]]
  $region18: #{tpu_custom_call.1} parent=0
    _
  %s4 = ssub.s32 1, %s2
  %s5 = scalar_select 0, %s4, %s2
  $region1: #{tpu_custom_call.1} parent=0
    #allocation2 [shape = 'u8[8192]{0}', space=vmem, size = 0x2000, scoped, tag = 'input window, operand 0, single buffered']
    #allocation3 [shape = 's32[1]{0}', space=sflag, size = 0x4, scoped, tag = 'scoped memory for tpu_custom_call.1']
    #allocation4 [shape = 's32[1]{0}', space=sflag, size = 0x4, scoped, tag = 'scoped memory for tpu_custom_call.1']
    #allocation5 [shape = 'u8[8192]{0}', space=vmem, size = 0x2000, scoped, tag = 'output window, operand 0, single buffered']
    %6 = vsyncpa [#allocation3], 0
    %7 = vsyncpa [#allocation4], 0
    // Predicated region
    $region2: #{tpu_custom_call.1} parent=1 // pred_check
      _
    $region3: #{tpu_custom_call.1} parent=1 // pred_check_branch
      %9 = sbr.rel (0) target = $region5
    $region4: #{tpu_custom_call.1} parent=1 // pred_region
      %s11 = ssub.s32 256, 256
      %12 = vsyncadd [#allocation3], %s11
      %s13 = sshll.u32 [#allocation2], 4
      %s14 = int_to_ptr.vmem [resolvable:$true] %s13
      %19 = dma.hbm_to_vmem [thread:$0]  %s0, 256, %s14, [#allocation3], 128, 128, 8
    $region5: #{tpu_custom_call.1} parent=1 // pred_fallthru
      _
    // Predicated region
    $region6: #{tpu_custom_call.1} parent=1 // pred_check
      _
    $region7: #{tpu_custom_call.1} parent=1 // pred_check_branch
      %21 = sbr.rel (0) target = $region9
    $region8: #{tpu_custom_call.1} parent=1 // pred_region
      %22 = dma.done [#allocation3], 256
    $region9: #{tpu_custom_call.1} parent=1 // pred_fallthru
      _
    %v23 = vld [vmem:[#allocation2] sm:$0xff]
    %v24 = vld [vmem:[#allocation2 + $0x8] sm:$0x1]
    %vm25 = vcmask 72704
    %26 = vst.msk [vmem:[#allocation5] sm:$0xff] %vm25, %v23
    %vm27 = vcmask 65536
    %28 = vst.msk [vmem:[#allocation5 + $0x8] sm:$0x1] %vm27, %v24
    // Predicated region
    $region10: #{tpu_custom_call.1} parent=1 // pred_check
      _
    $region11: #{tpu_custom_call.1} parent=1 // pred_check_branch
      %30 = sbr.rel (0) target = $region13
    $region12: #{tpu_custom_call.1} parent=1 // pred_region
      %s32 = ssub.s32 256, 256
      %33 = vsyncadd [#allocation4], %s32
      %s34 = sshll.u32 [#allocation5], 4
      %s35 = int_to_ptr.vmem [resolvable:$true] %s34
      %40 = dma.vmem_to_hbm [thread:$0]  %s35, 256, %s1, [#allocation4], 128, 128, 8
    $region13: #{tpu_custom_call.1} parent=1 // pred_fallthru
      _
    // Predicated region
    $region14: #{tpu_custom_call.1} parent=1 // pred_check
      _
    $region15: #{tpu_custom_call.1} parent=1 // pred_check_branch
      %42 = sbr.rel (0) target = $region17
    $region16: #{tpu_custom_call.1} parent=1 // pred_region
      %43 = dma.done [#allocation4], 256
    $region17: #{tpu_custom_call.1} parent=1 // pred_fallthru
      _
    %44 = vsyncpa [#allocation3], 1
    %45 = vsyncpa [#allocation4], 1

</llo_original>
